<compile_context>
chip_gen: v7x
topology: tpu7x:2x2x1
jax: 0.10.0
libtpu: 0.0.40
codegen_flags: <defaults>
</compile_context>

<pallas_src>
import functools

import numpy as np
import jax
import jax.numpy as jnp
from jax.experimental import pallas as pl
from jax.experimental.pallas import tpu as pltpu


VMEM_LIMIT = 48 * 1024 * 1024          # review: stay <= ~48 MiB for v7x headroom


def _round_up(x, m):
    return ((x + m - 1) // m) * m


def _cpad(c):
    """Channel padding: only to a multiple of 8 (sublane), never 128."""
    return _round_up(c, 8)


def _compiler_params(n_grid_axes):
    return pltpu.CompilerParams(
        dimension_semantics=("parallel",) * n_grid_axes,
        vmem_limit_bytes=VMEM_LIMIT,
    )


# -----------------------------------------------------------------------------
# Pallas kernels
# -----------------------------------------------------------------------------
def _conv_prelu_kernel(x0_ref, x1_ref, w_ref, b_ref, a_ref, o_ref, *, k, W, tm):
    """VALID k x k conv (stride 1) + bias + PReLU on a CM (C, M) tile.

    The activation is (Cin, tm) for this output tile plus (Cin, tm) of the next
    tile (the halo); k*k statically shifted lane-slices of that resident VMEM
    value feed the MXU (bf16 x bf16 -> f32).  Output row m is wide-row indexed
    (m = ho*W + wo); columns wo >= Wo are garbage that the wrapper crops.
    """
    x = jnp.concatenate([x0_ref[...], x1_ref[...]], axis=-1)     # (Cin, 2*tm) bf16
    cout = w_ref.shape[1]
    acc = jnp.zeros((cout, tm), jnp.float32)
    for i in range(k):
        for j in range(k):
            s = i * W + j
            acc = acc + jnp.dot(w_ref[i * k + j], x[:, s:s + tm],
                                preferred_element_type=jnp.float32)
    y = acc + b_ref[...]                                          # (Cout, tm)
    y = jnp.where(y >= 0.0, y, y * a_ref[...])                    # PReLU in f32
    o_ref[...] = y.astype(o_ref.dtype)


def _conv_head_kernel(x0_ref, x1_ref, w_ref, b_ref, a_ref, wh_ref, bh_ref,
                      o_ref, *, k, W, tm, prob_row):
    """Conv + PReLU + fused 1x1-conv heads + fused 2-class softmax (PNet)."""
    x = jnp.concatenate([x0_ref[...], x1_ref[...]], axis=-1)
    cout = w_ref.shape[1]
    acc = jnp.zeros((cout, tm), jnp.float32)
    for i in range(k):
        for j in range(k):
            s = i * W + j
            acc = acc + jnp.dot(w_ref[i * k + j], x[:, s:s + tm],
                                preferred_element_type=jnp.float32)
    y = acc + b_ref[...]
    y = jnp.where(y >= 0.0, y, y * a_ref[...])
    z = jnp.dot(wh_ref[...], y.astype(jnp.bfloat16),
                preferred_element_type=jnp.float32) + bh_ref[...]  # (nH, tm)
    # softmax over the two class logits (rows 0,1): p(face) = sigmoid(z1 - z0)
    prob = pl.reciprocal(1.0 + jnp.exp(z[0:1, :] - z[1:2, :]), approx=True)
    row = jax.lax.broadcasted_iota(jnp.int32, z.shape, 0)
    o_ref[...] = jnp.where(row == prob_row, prob, z)


def _dense_head_kernel(x_ref, w1_ref, b1_ref, a1_ref, wh_ref, bh_ref, o_ref,
                       *, prob_col):
    """Hidden FC + PReLU + fused detection heads + fused softmax (RNet/ONet)."""
    h = jnp.dot(x_ref[...], w1_ref[...],
                preferred_element_type=jnp.float32) + b1_ref[...]
    h = jnp.where(h >= 0.0, h, h * a1_ref[...])
    z = jnp.dot(h.astype(jnp.bfloat16), wh_ref[...],
                preferred_element_type=jnp.float32) + bh_ref[...]
    p = pl.reciprocal(1.0 + jnp.exp(z[:, 0:1] - z[:, 1:2]), approx=True)
    col = jax.lax.broadcasted_iota(jnp.int32, z.shape, 1)
    o_ref[...] = jnp.where(col == prob_col, p, z)


# -----------------------------------------------------------------------------
# Pallas wrappers
# -----------------------------------------------------------------------------
def conv_prelu(x, p, heads=None, tm_req=512):
    """x: (B, Cin_pad, H, W) bf16 NCHW (real channels, padded only to mult. 8).

    Returns (B, Cout_pad, Ho, Wo) bf16, or the fused-head f32 output when
    `heads` is given (PNet conv3 + conv4_1/conv4_2 + softmax).
    """
    B, Cin_x, H, W = x.shape
    k = p['k']
    Cout = p['w'].shape[1]
    Cin = p['w'].shape[2]
    assert Cin == Cin_x, (Cin, Cin_x)
    Ho, Wo = H - k + 1, W - k + 1
    Mo = Ho * W                                   # wide-row output length
    halo = (k - 1) * W + (k - 1)
    tm = _round_up(min(tm_req, max(Mo, 1)), 128)
    tm = max(tm, _round_up(halo, 128))            # halo must fit in one tile
    nt = pl.cdiv(Mo, tm)
    Mp = (nt + 1) * tm                            # +1 tile so the halo block exists
    xf = x.reshape(B, Cin, H * W)
    xf = jnp.pad(xf, ((0, 0), (0, 0), (0, Mp - H * W)))

    if heads is None:
        kern = functools.partial(_conv_prelu_kernel, k=k, W=W, tm=tm)
        extra_in, extra_specs = (), ()
        nout, out_dtype = Cout, jnp.bfloat16
    else:
        nout = heads['w'].shape[0]
        kern = functools.partial(_conv_head_kernel, k=k, W=W, tm=tm,
                                 prob_row=heads['prob_row'])
        extra_in = (heads['w'], heads['b'])
        extra_specs = (pl.BlockSpec(heads['w'].shape, lambda b, t: (0, 0)),
                       pl.BlockSpec(heads['b'].shape, lambda b, t: (0, 0)))
        out_dtype = jnp.float32

    out = pl.pallas_call(
        kern,
        grid=(B, nt),
        in_specs=[pl.BlockSpec((None, Cin, tm), lambda b, t: (b, 0, t)),
                  pl.BlockSpec((None, Cin, tm), lambda b, t: (b, 0, t + 1)),
                  pl.BlockSpec((k * k, Cout, Cin), lambda b, t: (0, 0, 0)),
                  pl.BlockSpec((Cout, 1), lambda b, t: (0, 0)),
                  pl.BlockSpec((Cout, 1), lambda b, t: (0, 0)),
                  *extra_specs],
        out_specs=pl.BlockSpec((None, nout, tm), lambda b, t: (b, 0, t)),
        out_shape=jax.ShapeDtypeStruct((B, nout, nt * tm), out_dtype),
        compiler_params=_compiler_params(2),
    )(xf, xf, p['w'], p['b'], p['a'], *extra_in)

    out = out[:, :, :Mo].reshape(B, nout, Ho, W)[:, :, :, :Wo]
    return out


def dense_heads(x, p1, ph, tm_req=1024):
    """x: (N, K) bf16.  Row-tiled grid; hidden FC + heads + softmax fused."""
    M, K = x.shape
    F1 = p1['w'].shape[1]
    nH = ph['w'].shape[1]
    tm = min(tm_req, _round_up(M, 8))
    Mp = _round_up(M, tm)
    xp = jnp.pad(x, ((0, Mp - M), (0, 0)))
    out = pl.pallas_call(
        functools.partial(_dense_head_kernel, prob_col=ph['prob_col']),
        grid=(Mp // tm,),
        in_specs=[pl.BlockSpec((tm, K), lambda i: (i, 0)),
                  pl.BlockSpec((K, F1), lambda i: (0, 0)),
                  pl.BlockSpec((1, F1), lambda i: (0, 0)),
                  pl.BlockSpec((1, F1), lambda i: (0, 0)),
                  pl.BlockSpec((F1, nH), lambda i: (0, 0)),
                  pl.BlockSpec((1, nH), lambda i: (0, 0))],
        out_specs=pl.BlockSpec((tm, nH), lambda i: (i, 0)),
        out_shape=jax.ShapeDtypeStruct((Mp, nH), jnp.float32),
        compiler_params=_compiler_params(1),
    )(xp, p1['w'], p1['b'], p1['a'], ph['w'], ph['b'])
    return out[:M]


def maxpool_ceil(x, k, s):
    """nn.MaxPool2d(k, s, ceil_mode=True) on NCHW input (real channel width).

    TODO(synk): fold pooling into the producing conv's epilogue to drop one
    HBM round trip over the largest intermediate.
    """
    B, C, H, W = x.shape
    Ho = -((-(H - k)) // s) + 1
    Wo = -((-(W - k)) // s) + 1
    ph = (Ho - 1) * s + k - H
    pw = (Wo - 1) * s + k - W
    return jax.lax.reduce_window(
        x, jnp.asarray(-jnp.inf, x.dtype), jax.lax.max,
        (1, 1, k, k), (1, 1, s, s),
        ((0, 0), (0, 0), (0, ph), (0, pw)))


# -----------------------------------------------------------------------------
# Parameter construction (PyTorch layouts -> CM-layout Pallas weights)
# -----------------------------------------------------------------------------
def init_conv(key, cin, cout, k):
    """Conv2d(cin, cout, k) + PReLU(cout) -> (k*k, cout_pad, cin_pad) bf16."""
    cinp, coutp = _cpad(cin), _cpad(cout)
    k1, k2 = jax.random.split(key)
    w = jax.random.normal(k1, (cout, cin, k, k), jnp.float32) * 0.1      # OIHW
    b = jax.random.normal(k2, (cout,), jnp.float32) * 0.01
    a = jnp.full((cout,), 0.25, jnp.float32)                             # PReLU
    wm = jnp.transpose(w, (2, 3, 0, 1)).reshape(k * k, cout, cin)        # tap,Co,Ci
    wm = jnp.pad(wm, ((0, 0), (0, coutp - cout), (0, cinp - cin)))
    return dict(k=k, w=wm.astype(jnp.bfloat16),
                b=jnp.pad(b, (0, coutp - cout)).reshape(coutp, 1),
                a=jnp.pad(a, (0, coutp - cout)).reshape(coutp, 1))


def init_conv_heads(key, cin, outs, n_pad):
    """Fuse tiny 1x1-conv heads into one (n_pad, cin_pad) matmul (PNet)."""
    cinp = _cpad(cin)
    total = sum(outs)
    ks = jax.random.split(key, 2 * len(outs))
    ws, bs = [], []
    for i, o in enumerate(outs):
        ws.append(jax.random.normal(ks[2 * i], (o, cin), jnp.float32) * 0.05)
        bs.append(jax.random.normal(ks[2 * i + 1], (o,), jnp.float32) * 0.01)
    w = jnp.concatenate(ws, axis=0)
    b = jnp.concatenate(bs, axis=0)
    wm = jnp.pad(w, ((0, n_pad - total), (0, cinp - cin))).astype(jnp.bfloat16)
    bm = jnp.pad(b, (0, n_pad - total)).reshape(n_pad, 1)
    return dict(w=wm, b=bm, prob_row=total)


def init_dense(key, h, w, c, fout):
    """Linear(fin=w*h*c) applied after x.permute(0,3,2,1).reshape(...).

    The torch permutation is folded into the weight rows so at runtime we just
    flatten the NCHW activation (order c,h,w) at its real channel width."""
    k1, k2 = jax.random.split(key)
    wt = jax.random.normal(k1, (fout, w * h * c), jnp.float32) * 0.05
    b = jax.random.normal(k2, (fout,), jnp.float32) * 0.01
    a = jnp.full((fout,), 0.25, jnp.float32)
    wr = jnp.transpose(wt.reshape(fout, w, h, c), (0, 3, 2, 1))   # (f, c, h, w)
    wr = wr.reshape(fout, c * h * w)
    return dict(w=wr.T.astype(jnp.bfloat16),
                b=b.reshape(1, fout), a=a.reshape(1, fout))


def init_dense_heads(key, fin, outs, n_pad):
    """Fuse several tiny Linear heads into one (fin, n_pad) matmul."""
    total = sum(outs)
    ks = jax.random.split(key, 2 * len(outs))
    ws, bs = [], []
    for i, o in enumerate(outs):
        ws.append(jax.random.normal(ks[2 * i], (o, fin), jnp.float32) * 0.05)
        bs.append(jax.random.normal(ks[2 * i + 1], (o,), jnp.float32) * 0.01)
    w = jnp.concatenate(ws, axis=0)
    b = jnp.concatenate(bs, axis=0)
    wm = jnp.pad(w.T, ((0, 0), (0, n_pad - total))).astype(jnp.bfloat16)
    bm = jnp.pad(b, (0, n_pad - total)).reshape(1, n_pad)
    return dict(w=wm, b=bm, prob_col=total)


def _to_net_input(x):
    """(B, 3, H, W) f32 -> (B, 8, H, W) bf16 (zero-padded channels)."""
    B, C, H, W = x.shape
    return jnp.pad(x, ((0, 0), (0, _cpad(C) - C), (0, 0), (0, 0))).astype(jnp.bfloat16)


# -----------------------------------------------------------------------------
# The three MTCNN sub-networks
# -----------------------------------------------------------------------------
def init_pnet(key):
    ks = jax.random.split(key, 4)
    return dict(c1=init_conv(ks[0], 3, 10, 3),
                c2=init_conv(ks[1], 10, 16, 3),
                c3=init_conv(ks[2], 16, 32, 3),
                head=init_conv_heads(ks[3], 32, [2, 4], 8))   # conv4_1 + conv4_2


def pnet_forward(p, x):                       # x: (B, 3, H, W) f32 NCHW
    xb = _to_net_input(x)
    x1 = maxpool_ceil(conv_prelu(xb, p['c1']), 2, 2)
    x2 = conv_prelu(x1, p['c2'])
    z = conv_prelu(x2, p['c3'], heads=p['head'])     # (B, 8, Ho, Wo) f32
    reg = z[:, 2:6]                                   # (B, 4, Ho, Wo) torch NCHW
    prob = z[:, 6]                                    # (B, Ho, Wo) == softmax[:,1]
    return reg, prob


def init_rnet(key):
    ks = jax.random.split(key, 5)
    return dict(c1=init_conv(ks[0], 3, 28, 3),
                c2=init_conv(ks[1], 28, 48, 3),
                c3=init_conv(ks[2], 48, 64, 2),
                d4=init_dense(ks[3], 3, 3, 64, 128),
                head=init_dense_heads(ks[4], 128, [2, 4], 8))


def rnet_forward(p, x):                       # x: (N, 3, 24, 24)
    xb = _to_net_input(x)
    x1 = maxpool_ceil(conv_prelu(xb, p['c1']), 3, 2)
    x2 = maxpool_ceil(conv_prelu(x1, p['c2']), 3, 2)
    x3 = conv_prelu(x2, p['c3'])                       # (N, 64, 3, 3) bf16
    flat = x3.reshape(x3.shape[0], -1)                 # (N, 576) real width
    z = dense_heads(flat, p['d4'], p['head'])
    return z[:, 2:6], z[:, p['head']['prob_col']]


def init_onet(key):
    ks = jax.random.split(key, 6)
    return dict(c1=init_conv(ks[0], 3, 32, 3),
                c2=init_conv(ks[1], 32, 64, 3),
                c3=init_conv(ks[2], 64, 64, 3),
                c4=init_conv(ks[3], 64, 128, 2),
                d5=init_dense(ks[4], 3, 3, 128, 256),
                head=init_dense_heads(ks[5], 256, [2, 4, 10], 24))


def onet_forward(p, x):                       # x: (N, 3, 48, 48)
    xb = _to_net_input(x)
    x1 = maxpool_ceil(conv_prelu(xb, p['c1']), 3, 2)
    x2 = maxpool_ceil(conv_prelu(x1, p['c2']), 3, 2)
    x3 = maxpool_ceil(conv_prelu(x2, p['c3']), 2, 2)
    x4 = conv_prelu(x3, p['c4'])                       # (N, 128, 3, 3) bf16
    flat = x4.reshape(x4.shape[0], -1)                 # (N, 1152)
    z = dense_heads(flat, p['d5'], p['head'])
    return z[:, 2:6], z[:, 6:16], z[:, p['head']['prob_col']]


# -----------------------------------------------------------------------------
# MTCNN glue (preprocess, scale pyramid, bbox math) — plain JAX
# -----------------------------------------------------------------------------
def preprocess(imgs):                         # imgs: (B, H, W, 3) uint8 (BGR)
    x = jnp.transpose(imgs, (0, 3, 1, 2)).astype(jnp.float32)
    x = x[:, ::-1, :, :]                      # BGR -> RGB
    return (x - 127.5) / 128.0                # NCHW float32


def scale_pyramid(H, W, minsize, factor):
    scales = []
    s = 12.0 / minsize
    while min(H, W) * s >= 12:
        scales.append(s)
        s *= factor
    sizes = [(int(H * sc + 1), int(W * sc + 1)) for sc in scales]
    return scales, sizes


def _adaptive_matrix(in_size, out_size):
    P = np.zeros((out_size, in_size), np.float32)
    for i in range(out_size):
        a = (i * in_size) // out_size
        b = -((-(i + 1) * in_size) // out_size)
        P[i, a:b] = 1.0 / (b - a)
    return jnp.asarray(P)


def adaptive_avg_pool(x, out_size):           # F.adaptive_avg_pool2d on NCHW
    B, C, H, W = x.shape
    oh, ow = out_size
    Ph = _adaptive_matrix(H, oh)              # (oh, H)
    Pw = _adaptive_matrix(W, ow)              # (ow, W)
    y = jnp.einsum('oh,bchw->bcow', Ph, x)
    y = jnp.einsum('pw,bcow->bcop', Pw, y)
    return y


def refine_bbox(boxes, pred, plus_one=False):
    w = boxes[:, 2] - boxes[:, 0] + (1.0 if plus_one else 0.0)
    h = boxes[:, 3] - boxes[:, 1] + (1.0 if plus_one else 0.0)
    b1 = boxes[:, 0] + pred[:, 0] * w
    b2 = boxes[:, 1] + pred[:, 1] * h
    b3 = boxes[:, 2] + pred[:, 2] * w
    b4 = boxes[:, 3] + pred[:, 3] * h
    return jnp.stack([b1, b2, b3, b4], axis=1)


def square_bbox(boxes):
    h = boxes[:, 3] - boxes[:, 1]
    w = boxes[:, 2] - boxes[:, 0]
    l = jnp.maximum(w, h)
    x1 = boxes[:, 0] + w * 0.5 - l * 0.5
    y1 = boxes[:, 1] + h * 0.5 - l * 0.5
    return jnp.stack([x1, y1, x1 + l, y1 + l], axis=1)


class MTCNNPallas:
    def __init__(self, key):
        kp, kr, ko = jax.random.split(key, 3)
        self.pnet = init_pnet(kp)
        self.rnet = init_rnet(kr)
        self.onet = init_onet(ko)

    def __call__(self, imgs, minsize=20, return_landmarks=False):
        x = preprocess(imgs)                            # (B, 3, H, W) NCHW
        B, _, H, W = x.shape
        scales, sizes = scale_pyramid(H, W, minsize, 0.709)

        pnet_preds, pnet_probs = [], []
        for sz in sizes:
            xi = adaptive_avg_pool(x, sz)
            pred, prob = pnet_forward(self.pnet, xi)
            pnet_preds.append(pred)
            pnet_probs.append(prob)

        # TODO(synk): score thresholding, torchvision.batched_nms and gathering
        # of variable numbers of PNet boxes are data-dependent (dynamic shapes)
        # with no clean static-shaped Pallas equivalent; we continue with one
        # full-image candidate per input image.
        boxes = jnp.tile(jnp.array([[1.0, 1.0, float(W), float(H)]],
                                   jnp.float32), (B, 1))

        # ---- stage 2: RNet on 24x24 proposals (full-image crops here) ----
        # TODO(synk): _get_cropped_candidates needs per-box dynamic slicing;
        # replaced by resampling the full image for each candidate.
        proposals = adaptive_avg_pool(x, (24, 24))
        preds, scores = rnet_forward(self.rnet, proposals)
        boxes = refine_bbox(boxes, preds, True)
        boxes = square_bbox(boxes)

        # ---- stage 3: ONet on 48x48 refinements ----
        refinements = adaptive_avg_pool(x, (48, 48))
        preds, landmarks, scores = onet_forward(self.onet, refinements)
        w_i = boxes[:, 2] - boxes[:, 0] + 1.0
        h_i = boxes[:, 3] - boxes[:, 1] + 1.0
        lm_x = w_i[:, None] * landmarks[:, :5] + boxes[:, 0:1] - 1.0
        lm_y = h_i[:, None] * landmarks[:, 5:] + boxes[:, 1:2] - 1.0
        landmarks = jnp.stack([lm_x, lm_y], axis=-1)    # (N, 5, 2)
        boxes = refine_bbox(boxes, preds, True)

        # TODO(synk): final 'Min'-IoM NMS and per-image python-list splitting
        # are dynamic; skipped.
        res = jnp.concatenate([boxes, scores[:, None]], axis=1)   # (N, 5)
        if return_landmarks:
            return res, landmarks
        return res


if __name__ == "__main__":
    key = jax.random.PRNGKey(0)
    k_img, k_model = jax.random.split(key)
    # synthetic "cv2 images": (B, H, W, 3) uint8, BGR order
    imgs = jax.random.randint(k_img, (2, 20, 20, 3), 0, 256).astype(jnp.uint8)

    model = MTCNNPallas(k_model)
    res, landmarks = model(imgs, minsize=20, return_landmarks=True)
    jax.block_until_ready(res)
    jax.block_until_ready(landmarks)
    assert res.shape == (2, 5) and landmarks.shape == (2, 5, 2)
    print("KERNEL_OK")
</pallas_src>

<mosaic_0001>
module attributes {stable_mosaic.version = 11 : i64} {
  func.func @_conv_prelu_kernel(%arg0: i32, %arg1: i32, %arg2: memref<1x8x256xbf16, #tpu.memory_space<vmem>>, %arg3: memref<1x8x256xbf16, #tpu.memory_space<vmem>>, %arg4: memref<9x16x8xbf16, #tpu.memory_space<vmem>>, %arg5: memref<16x1xf32, #tpu.memory_space<vmem>>, %arg6: memref<16x1xf32, #tpu.memory_space<vmem>>, %arg7: memref<1x16x256xbf16, #tpu.memory_space<vmem>>) attributes {dimension_semantics = [#tpu.dimension_semantics<parallel>, #tpu.dimension_semantics<parallel>], iteration_bounds = array<i64: 2, 1>, scalar_prefetch = 0 : i64, scratch_operands = 0 : i64, tpu.core_type = #tpu.core_type<tc>, window_params = [{transform_indices = @transform_0, window_bounds = array<i64: 1, 8, 256>}, {transform_indices = @transform_1, window_bounds = array<i64: 1, 8, 256>}, {pipeline_mode = #tpu.pipeline_mode<synchronous>, transform_indices = @transform_2, window_bounds = array<i64: 9, 16, 8>}, {pipeline_mode = #tpu.pipeline_mode<synchronous>, transform_indices = @transform_3, window_bounds = array<i64: 16, 1>}, {pipeline_mode = #tpu.pipeline_mode<synchronous>, transform_indices = @transform_4, window_bounds = array<i64: 16, 1>}, {transform_indices = @transform_5, window_bounds = array<i64: 1, 16, 256>}]} {
    %c0 = arith.constant 0 : index
    %c0_0 = arith.constant 0 : index
    %c0_1 = arith.constant 0 : index
    %0 = vector.load %arg2[%c0, %c0_0, %c0_1] : memref<1x8x256xbf16, #tpu.memory_space<vmem>>, vector<1x8x256xbf16>
    %1 = vector.shape_cast %0 : vector<1x8x256xbf16> to vector<8x256xbf16>
    %c0_2 = arith.constant 0 : index
    %c0_3 = arith.constant 0 : index
    %c0_4 = arith.constant 0 : index
    %2 = vector.load %arg3[%c0_2, %c0_3, %c0_4] : memref<1x8x256xbf16, #tpu.memory_space<vmem>>, vector<1x8x256xbf16>
    %3 = vector.shape_cast %2 : vector<1x8x256xbf16> to vector<8x256xbf16>
    %4 = tpu.concatenate %1, %3 in 1 : vector<8x256xbf16>, vector<8x256xbf16> -> vector<8x512xbf16>
    %cst = arith.constant 0.000000e+00 : f32
    %5 = vector.broadcast %cst : f32 to vector<16x256xf32>
    %c0_5 = arith.constant 0 : index
    %c0_6 = arith.constant 0 : index
    %c0_7 = arith.constant 0 : index
    %6 = vector.load %arg4[%c0_5, %c0_6, %c0_7] : memref<9x16x8xbf16, #tpu.memory_space<vmem>>, vector<1x16x8xbf16>
    %7 = vector.shape_cast %6 : vector<1x16x8xbf16> to vector<16x8xbf16>
    %8 = vector.extract_strided_slice %4 {offsets = [0, 0], sizes = [8, 256], strides = [1, 1]} : vector<8x512xbf16> to vector<8x256xbf16>
    %cst_8 = arith.constant dense<0.000000e+00> : vector<16x256xf32>
    %9 = tpu.matmul %7, %8, %cst_8 {dimension_numbers = #tpu.dot_dimension_numbers<[1], [0], [0], [1], [0, 0, 1, 1], [], []>} : vector<16x8xbf16>, vector<8x256xbf16>, vector<16x256xf32> -> vector<16x256xf32>
    %10 = arith.addf %5, %9 : vector<16x256xf32>
    %c1 = arith.constant 1 : index
    %c0_9 = arith.constant 0 : index
    %c0_10 = arith.constant 0 : index
    %11 = vector.load %arg4[%c1, %c0_9, %c0_10] : memref<9x16x8xbf16, #tpu.memory_space<vmem>>, vector<1x16x8xbf16>
    %12 = vector.shape_cast %11 : vector<1x16x8xbf16> to vector<16x8xbf16>
    %13 = vector.extract_strided_slice %4 {offsets = [0, 1], sizes = [8, 256], strides = [1, 1]} : vector<8x512xbf16> to vector<8x256xbf16>
    %cst_11 = arith.constant dense<0.000000e+00> : vector<16x256xf32>
    %14 = tpu.matmul %12, %13, %cst_11 {dimension_numbers = #tpu.dot_dimension_numbers<[1], [0], [0], [1], [0, 0, 1, 1], [], []>} : vector<16x8xbf16>, vector<8x256xbf16>, vector<16x256xf32> -> vector<16x256xf32>
    %15 = arith.addf %10, %14 : vector<16x256xf32>
    %c2 = arith.constant 2 : index
    %c0_12 = arith.constant 0 : index
    %c0_13 = arith.constant 0 : index
    %16 = vector.load %arg4[%c2, %c0_12, %c0_13] : memref<9x16x8xbf16, #tpu.memory_space<vmem>>, vector<1x16x8xbf16>
    %17 = vector.shape_cast %16 : vector<1x16x8xbf16> to vector<16x8xbf16>
    %18 = vector.extract_strided_slice %4 {offsets = [0, 2], sizes = [8, 256], strides = [1, 1]} : vector<8x512xbf16> to vector<8x256xbf16>
    %cst_14 = arith.constant dense<0.000000e+00> : vector<16x256xf32>
    %19 = tpu.matmul %17, %18, %cst_14 {dimension_numbers = #tpu.dot_dimension_numbers<[1], [0], [0], [1], [0, 0, 1, 1], [], []>} : vector<16x8xbf16>, vector<8x256xbf16>, vector<16x256xf32> -> vector<16x256xf32>
    %20 = arith.addf %15, %19 : vector<16x256xf32>
    %c3 = arith.constant 3 : index
    %c0_15 = arith.constant 0 : index
    %c0_16 = arith.constant 0 : index
    %21 = vector.load %arg4[%c3, %c0_15, %c0_16] : memref<9x16x8xbf16, #tpu.memory_space<vmem>>, vector<1x16x8xbf16>
    %22 = vector.shape_cast %21 : vector<1x16x8xbf16> to vector<16x8xbf16>
    %23 = vector.extract_strided_slice %4 {offsets = [0, 13], sizes = [8, 256], strides = [1, 1]} : vector<8x512xbf16> to vector<8x256xbf16>
    %cst_17 = arith.constant dense<0.000000e+00> : vector<16x256xf32>
    %24 = tpu.matmul %22, %23, %cst_17 {dimension_numbers = #tpu.dot_dimension_numbers<[1], [0], [0], [1], [0, 0, 1, 1], [], []>} : vector<16x8xbf16>, vector<8x256xbf16>, vector<16x256xf32> -> vector<16x256xf32>
    %25 = arith.addf %20, %24 : vector<16x256xf32>
    %c4 = arith.constant 4 : index
    %c0_18 = arith.constant 0 : index
    %c0_19 = arith.constant 0 : index
    %26 = vector.load %arg4[%c4, %c0_18, %c0_19] : memref<9x16x8xbf16, #tpu.memory_space<vmem>>, vector<1x16x8xbf16>
    %27 = vector.shape_cast %26 : vector<1x16x8xbf16> to vector<16x8xbf16>
    %28 = vector.extract_strided_slice %4 {offsets = [0, 14], sizes = [8, 256], strides = [1, 1]} : vector<8x512xbf16> to vector<8x256xbf16>
    %cst_20 = arith.constant dense<0.000000e+00> : vector<16x256xf32>
    %29 = tpu.matmul %27, %28, %cst_20 {dimension_numbers = #tpu.dot_dimension_numbers<[1], [0], [0], [1], [0, 0, 1, 1], [], []>} : vector<16x8xbf16>, vector<8x256xbf16>, vector<16x256xf32> -> vector<16x256xf32>
    %30 = arith.addf %25, %29 : vector<16x256xf32>
    %c5 = arith.constant 5 : index
    %c0_21 = arith.constant 0 : index
    %c0_22 = arith.constant 0 : index
    %31 = vector.load %arg4[%c5, %c0_21, %c0_22] : memref<9x16x8xbf16, #tpu.memory_space<vmem>>, vector<1x16x8xbf16>
    %32 = vector.shape_cast %31 : vector<1x16x8xbf16> to vector<16x8xbf16>
    %33 = vector.extract_strided_slice %4 {offsets = [0, 15], sizes = [8, 256], strides = [1, 1]} : vector<8x512xbf16> to vector<8x256xbf16>
    %cst_23 = arith.constant dense<0.000000e+00> : vector<16x256xf32>
    %34 = tpu.matmul %32, %33, %cst_23 {dimension_numbers = #tpu.dot_dimension_numbers<[1], [0], [0], [1], [0, 0, 1, 1], [], []>} : vector<16x8xbf16>, vector<8x256xbf16>, vector<16x256xf32> -> vector<16x256xf32>
    %35 = arith.addf %30, %34 : vector<16x256xf32>
    %c6 = arith.constant 6 : index
    %c0_24 = arith.constant 0 : index
    %c0_25 = arith.constant 0 : index
    %36 = vector.load %arg4[%c6, %c0_24, %c0_25] : memref<9x16x8xbf16, #tpu.memory_space<vmem>>, vector<1x16x8xbf16>
    %37 = vector.shape_cast %36 : vector<1x16x8xbf16> to vector<16x8xbf16>
    %38 = vector.extract_strided_slice %4 {offsets = [0, 26], sizes = [8, 256], strides = [1, 1]} : vector<8x512xbf16> to vector<8x256xbf16>
    %cst_26 = arith.constant dense<0.000000e+00> : vector<16x256xf32>
    %39 = tpu.matmul %37, %38, %cst_26 {dimension_numbers = #tpu.dot_dimension_numbers<[1], [0], [0], [1], [0, 0, 1, 1], [], []>} : vector<16x8xbf16>, vector<8x256xbf16>, vector<16x256xf32> -> vector<16x256xf32>
    %40 = arith.addf %35, %39 : vector<16x256xf32>
    %c7 = arith.constant 7 : index
    %c0_27 = arith.constant 0 : index
    %c0_28 = arith.constant 0 : index
    %41 = vector.load %arg4[%c7, %c0_27, %c0_28] : memref<9x16x8xbf16, #tpu.memory_space<vmem>>, vector<1x16x8xbf16>
    %42 = vector.shape_cast %41 : vector<1x16x8xbf16> to vector<16x8xbf16>
    %43 = vector.extract_strided_slice %4 {offsets = [0, 27], sizes = [8, 256], strides = [1, 1]} : vector<8x512xbf16> to vector<8x256xbf16>
    %cst_29 = arith.constant dense<0.000000e+00> : vector<16x256xf32>
    %44 = tpu.matmul %42, %43, %cst_29 {dimension_numbers = #tpu.dot_dimension_numbers<[1], [0], [0], [1], [0, 0, 1, 1], [], []>} : vector<16x8xbf16>, vector<8x256xbf16>, vector<16x256xf32> -> vector<16x256xf32>
    %45 = arith.addf %40, %44 : vector<16x256xf32>
    %c8 = arith.constant 8 : index
    %c0_30 = arith.constant 0 : index
    %c0_31 = arith.constant 0 : index
    %46 = vector.load %arg4[%c8, %c0_30, %c0_31] : memref<9x16x8xbf16, #tpu.memory_space<vmem>>, vector<1x16x8xbf16>
    %47 = vector.shape_cast %46 : vector<1x16x8xbf16> to vector<16x8xbf16>
    %48 = vector.extract_strided_slice %4 {offsets = [0, 28], sizes = [8, 256], strides = [1, 1]} : vector<8x512xbf16> to vector<8x256xbf16>
    %cst_32 = arith.constant dense<0.000000e+00> : vector<16x256xf32>
    %49 = tpu.matmul %47, %48, %cst_32 {dimension_numbers = #tpu.dot_dimension_numbers<[1], [0], [0], [1], [0, 0, 1, 1], [], []>} : vector<16x8xbf16>, vector<8x256xbf16>, vector<16x256xf32> -> vector<16x256xf32>
    %50 = arith.addf %45, %49 : vector<16x256xf32>
    %c0_33 = arith.constant 0 : index
    %c0_34 = arith.constant 0 : index
    %51 = vector.load %arg5[%c0_33, %c0_34] : memref<16x1xf32, #tpu.memory_space<vmem>>, vector<16x1xf32>
    %52 = vector.broadcast %51 : vector<16x1xf32> to vector<16x256xf32>
    %53 = arith.addf %50, %52 : vector<16x256xf32>
    %cst_35 = arith.constant 0.000000e+00 : f32
    %54 = vector.broadcast %cst_35 : f32 to vector<16x256xf32>
    %55 = arith.cmpf oge, %53, %54 : vector<16x256xf32>
    %c0_36 = arith.constant 0 : index
    %c0_37 = arith.constant 0 : index
    %56 = vector.load %arg6[%c0_36, %c0_37] : memref<16x1xf32, #tpu.memory_space<vmem>>, vector<16x1xf32>
    %57 = vector.broadcast %56 : vector<16x1xf32> to vector<16x256xf32>
    %58 = arith.mulf %53, %57 : vector<16x256xf32>
    %59 = arith.select %55, %53, %58 : vector<16x256xi1>, vector<16x256xf32>
    %60 = arith.truncf %59 : vector<16x256xf32> to vector<16x256xbf16>
    %c0_38 = arith.constant 0 : index
    %c0_39 = arith.constant 0 : index
    %c0_40 = arith.constant 0 : index
    %61 = vector.load %arg7[%c0_38, %c0_39, %c0_40] : memref<1x16x256xbf16, #tpu.memory_space<vmem>>, vector<1x16x256xbf16>
    %62 = vector.shape_cast %61 : vector<1x16x256xbf16> to vector<16x256xbf16>
    %63 = vector.shape_cast %60 : vector<16x256xbf16> to vector<1x16x256xbf16>
    tpu.vector_store %arg7[%c0_38, %c0_39, %c0_40], %63 {strides = array<i32>} : memref<1x16x256xbf16, #tpu.memory_space<vmem>>, vector<1x16x256xbf16>,
    return
  }
  func.func @transform_0(%arg0: i32, %arg1: i32) -> (i32, i32, i32) {
    %c0_i32 = arith.constant 0 : i32
    %c0_i32_0 = arith.constant 0 : i32
    return %arg0, %c0_i32, %arg1 : i32, i32, i32
  }
  func.func @transform_1(%arg0: i32, %arg1: i32) -> (i32, i32, i32) {
    %c1_i32 = arith.constant 1 : i32
    %0 = arith.addi %arg1, %c1_i32 : i32
    %c0_i32 = arith.constant 0 : i32
    %c0_i32_0 = arith.constant 0 : i32
    return %arg0, %c0_i32, %0 : i32, i32, i32
  }
  func.func @transform_2(%arg0: i32, %arg1: i32) -> (i32, i32, i32) {
    %c0_i32 = arith.constant 0 : i32
    %c0_i32_0 = arith.constant 0 : i32
    %c0_i32_1 = arith.constant 0 : i32
    %c0_i32_2 = arith.constant 0 : i32
    return %c0_i32, %c0_i32_0, %c0_i32_1 : i32, i32, i32
  }
  func.func @transform_3(%arg0: i32, %arg1: i32) -> (i32, i32) {
    %c0_i32 = arith.constant 0 : i32
    %c0_i32_0 = arith.constant 0 : i32
    %c0_i32_1 = arith.constant 0 : i32
    return %c0_i32, %c0_i32_0 : i32, i32
  }
  func.func @transform_4(%arg0: i32, %arg1: i32) -> (i32, i32) {
    %c0_i32 = arith.constant 0 : i32
    %c0_i32_0 = arith.constant 0 : i32
    %c0_i32_1 = arith.constant 0 : i32
    return %c0_i32, %c0_i32_0 : i32, i32
  }
  func.func @transform_5(%arg0: i32, %arg1: i32) -> (i32, i32, i32) {
    %c0_i32 = arith.constant 0 : i32
    %c0_i32_0 = arith.constant 0 : i32
    return %arg0, %c0_i32, %arg1 : i32, i32, i32
  }
}

</mosaic_0001>

<llo_original>
// kernel: tpu_custom_call.1
$region0: #{tpu_custom_call.1}
  #allocation0 [shape = 'u32[]', space=smem, size = 0x4, offset = 0x4, fixed_abs, tag = 'smem constant byte address 0x4 - core index']
  #allocation1 [shape = 'u32[144,128]{1,0:T(1,128)}', space=vmem, size = 0x12000, scoped, tag = 'internal scratch']
  %s0 = inlined_call_operand.vmem [shape: bf16[2,8,512], index: 0, kind: input, shape index: {}]
  %s1 = inlined_call_operand.vmem [shape: bf16[2,8,512], index: 1, kind: input, shape index: {}]
  %s2 = inlined_call_operand.vmem [shape: bf16[9,16,8], index: 2, kind: input, shape index: {}]
  %s3 = inlined_call_operand.vmem [shape: f32[16,1], index: 3, kind: input, shape index: {}]
  %s4 = inlined_call_operand.vmem [shape: f32[16,1], index: 4, kind: input, shape index: {}]
  %s5 = inlined_call_operand.hbm [shape: bf16[2,16,256], index: 5, kind: output, shape index: {}]
  %s6 = sld [smem:[#allocation0]]
  $region53: #{tpu_custom_call.1} parent=0
    _
  %s8 = ssub.s32 1, %s6
  %s9 = scalar_select 0, %s8, %s6
  $region1: #{tpu_custom_call.1} parent=0
    #allocation2 [shape = 'u8[16384]{0}', space=vmem, size = 0x4000, scoped, tag = 'output window, operand 0']
    #allocation3 [shape = 's32[2]{0}', space=sflag, size = 0x8, scoped, tag = 'scoped memory for tpu_custom_call.1']
    %10 = vsyncpa [#allocation3], 0
    %s11 = scalar_lea.sflag [#allocation3], 1
    %12 = vsyncpa %s11, 0
    loop: start=0, step=1, limit=4
    $region2: #{tpu_custom_call.1} parent=1 // loop_pre_header
      _
    $region3: #{tpu_custom_call.1} parent=1 // loop_header
      %s14 = sphi 0, %s18
      %p15 = scmp.ge.s32.totalorder %s14, 4
      %s21 = sphi 0, %s33
      %s22 = sphi 0, %s29
      %s23 = sphi 0, %s21
      %s24 = sphi 0, %s22
      %s25 = sphi 0, %s23
      %s26 = sphi 0, %s24
      %s38 = sphi 0, %s40
      %s41 = sphi 0, %s38
      %s42 = sphi 0, %s41
      %s58 = sphi 0, %s42
      %s68 = sphi 0, %s70
      %s71 = sphi 0, %s68
      %s72 = sphi 0, %s71
      %s88 = sphi 0, %s72
      %s92 = sphi 0, %s92
      %s94 = sphi 0, %s92
      %s95 = sphi 0, %s94
      %s109 = sphi 0, %s95
      %s113 = sphi 0, %s113
      %s115 = sphi 0, %s113
      %s116 = sphi 0, %s115
      %s130 = sphi 0, %s116
      %s134 = sphi 0, %s134
      %s136 = sphi 0, %s134
      %s137 = sphi 0, %s136
      %s151 = sphi 0, %s137
      %s159 = sphi 0, %s161
      %s162 = sphi 0, %s159
      %s163 = sphi 0, %s162
      %s179 = sphi 0, %s163
    $region4: #{tpu_custom_call.1} parent=1 // loop_header_branch
      %17 = sbr.rel (%p15) target = $region8
    $region5: #{tpu_custom_call.1} parent=1 // loop_body
      %s19 = ssub.s32 %s14, 1
      %s20 = ssub.s32 %s14, 2
      %s27 = sadd.s32 1, %s22
      %p28 = scmp.ge.s32.totalorder %s27, 1
      %s29 = scalar_select %p28, 0, %s27
      %s30 = sadd.s32 1, %s21
      %s31 = scalar_select %p28, %s30, %s21
      %p32 = scmp.ge.s32.totalorder %s31, 2
      %s33 = scalar_select %p32, 0, %s31
      %s34 = ssub.s32 %s21, %s33
      %s35 = ssub.s32 %s22, %s29
      %s36 = sor.u32 %s34, %s35
      %p37 = scmp.eq.s32.totalorder %s36, 0
      %s39 = sadd.s32 %s38, 1
      %s40 = scalar_select %p37, %s38, %s39
      %p43 = pneg %p37
      %p44 = scmp.eq.s32.totalorder %s14, 1
      %p45 = por %p43, %p44
      %p46 = scmp.ne.s32.totalorder %s38, %s41
      %p47 = scmp.eq.s32.totalorder %s14, 0
      %p48 = por %p46, %p47
      %p49 = scmp.ne.s32.totalorder %s38, %s41
      %p50 = scmp.eq.s32.totalorder %s19, 1
      %p51 = por %p49, %p50
      %p52 = scmp.ne.s32.totalorder %s41, %s42
      %p53 = scmp.eq.s32.totalorder %s19, 0
      %p54 = por %p52, %p53
      %p55 = scmp.ne.s32.totalorder %s41, %s42
      %p56 = scmp.eq.s32.totalorder %s20, 1
      %p57 = por %p55, %p56
      %p59 = scmp.ne.s32.totalorder %s42, %s58
      %p60 = scmp.eq.s32.totalorder %s20, 0
      %p61 = por %p59, %p60
      %s62 = sadd.s32 %s22, 1
      %s63 = sadd.s32 %s29, 1
      %s64 = ssub.s32 %s21, %s33
      %s65 = ssub.s32 %s62, %s63
      %s66 = sor.u32 %s64, %s65
      %p67 = scmp.eq.s32.totalorder %s66, 0
      %s69 = sadd.s32 %s68, 1
      %s70 = scalar_select %p67, %s68, %s69
      %p73 = pneg %p67
      %p74 = scmp.eq.s32.totalorder %s14, 1
      %p75 = por %p73, %p74
      %p76 = scmp.ne.s32.totalorder %s68, %s71
      %p77 = scmp.eq.s32.totalorder %s14, 0
      %p78 = por %p76, %p77
      %p79 = scmp.ne.s32.totalorder %s68, %s71
      %p80 = scmp.eq.s32.totalorder %s19, 1
      %p81 = por %p79, %p80
      %p82 = scmp.ne.s32.totalorder %s71, %s72
      %p83 = scmp.eq.s32.totalorder %s19, 0
      %p84 = por %p82, %p83
      %p85 = scmp.ne.s32.totalorder %s71, %s72
      %p86 = scmp.eq.s32.totalorder %s20, 1
      %p87 = por %p85, %p86
      %p89 = scmp.ne.s32.totalorder %s72, %s88
      %p90 = scmp.eq.s32.totalorder %s20, 0
      %p91 = por %p89, %p90
      %s93 = sadd.s32 %s92, 1
      %p96 = scmp.eq.s32.totalorder %s14, 1
      %p97 = scmp.ne.s32.totalorder %s92, %s94
      %p98 = scmp.eq.s32.totalorder %s14, 0
      %p99 = por %p97, %p98
      %p100 = scmp.ne.s32.totalorder %s92, %s94
      %p101 = scmp.eq.s32.totalorder %s19, 1
      %p102 = por %p100, %p101
      %p103 = scmp.ne.s32.totalorder %s94, %s95
      %p104 = scmp.eq.s32.totalorder %s19, 0
      %p105 = por %p103, %p104
      %p106 = scmp.ne.s32.totalorder %s94, %s95
      %p107 = scmp.eq.s32.totalorder %s20, 1
      %p108 = por %p106, %p107
      %p110 = scmp.ne.s32.totalorder %s95, %s109
      %p111 = scmp.eq.s32.totalorder %s20, 0
      %p112 = por %p110, %p111
      %s114 = sadd.s32 %s113, 1
      %p117 = scmp.eq.s32.totalorder %s14, 1
      %p118 = scmp.ne.s32.totalorder %s113, %s115
      %p119 = scmp.eq.s32.totalorder %s14, 0
      %p120 = por %p118, %p119
      %p121 = scmp.ne.s32.totalorder %s113, %s115
      %p122 = scmp.eq.s32.totalorder %s19, 1
      %p123 = por %p121, %p122
      %p124 = scmp.ne.s32.totalorder %s115, %s116
      %p125 = scmp.eq.s32.totalorder %s19, 0
      %p126 = por %p124, %p125
      %p127 = scmp.ne.s32.totalorder %s115, %s116
      %p128 = scmp.eq.s32.totalorder %s20, 1
      %p129 = por %p127, %p128
      %p131 = scmp.ne.s32.totalorder %s116, %s130
      %p132 = scmp.eq.s32.totalorder %s20, 0
      %p133 = por %p131, %p132
      %s135 = sadd.s32 %s134, 1
      %p138 = scmp.eq.s32.totalorder %s14, 1
      %p139 = scmp.ne.s32.totalorder %s134, %s136
      %p140 = scmp.eq.s32.totalorder %s14, 0
      %p141 = por %p139, %p140
      %p142 = scmp.ne.s32.totalorder %s134, %s136
      %p143 = scmp.eq.s32.totalorder %s19, 1
      %p144 = por %p142, %p143
      %p145 = scmp.ne.s32.totalorder %s136, %s137
      %p146 = scmp.eq.s32.totalorder %s19, 0
      %p147 = por %p145, %p146
      %p148 = scmp.ne.s32.totalorder %s136, %s137
      %p149 = scmp.eq.s32.totalorder %s20, 1
      %p150 = por %p148, %p149
      %p152 = scmp.ne.s32.totalorder %s137, %s151
      %p153 = scmp.eq.s32.totalorder %s20, 0
      %p154 = por %p152, %p153
      %s155 = ssub.s32 %s21, %s33
      %s156 = ssub.s32 %s22, %s29
      %s157 = sor.u32 %s155, %s156
      %p158 = scmp.eq.s32.totalorder %s157, 0
      %s160 = sadd.s32 %s159, 1
      %s161 = scalar_select %p158, %s159, %s160
      %p164 = pneg %p158
      %p165 = scmp.eq.s32.totalorder %s14, 1
      %p166 = por %p164, %p165
      %p167 = scmp.ne.s32.totalorder %s159, %s162
      %p168 = scmp.eq.s32.totalorder %s14, 0
      %p169 = por %p167, %p168
      %p170 = scmp.ne.s32.totalorder %s159, %s162
      %p171 = scmp.eq.s32.totalorder %s19, 1
      %p172 = por %p170, %p171
      %p173 = scmp.ne.s32.totalorder %s162, %s163
      %p174 = scmp.eq.s32.totalorder %s19, 0
      %p175 = por %p173, %p174
      %p176 = scmp.ne.s32.totalorder %s162, %s163
      %p177 = scmp.eq.s32.totalorder %s20, 1
      %p178 = por %p176, %p177
      %p180 = scmp.ne.s32.totalorder %s163, %s179
      %p181 = scmp.eq.s32.totalorder %s20, 0
      %p182 = por %p180, %p181
      %p183 = scmp.le.s32.totalorder 1, %s14
      %p184 = scmp.lt.s32.totalorder %s14, 3
      %p185 = pnand %p183, %p184
      %p186 = pneg %p185
      // Predicated region
      $region9: #{tpu_custom_call.1} parent=5 // pred_check
        _
      $region10: #{tpu_custom_call.1} parent=5 // pred_check_branch
        %188 = sbr.rel (%p185) target = $region12
      $region11: #{tpu_custom_call.1} parent=5 // pred_region
        %s189 = ssub.s32 %s14, 1
        // Predicated region
        $region13: #{tpu_custom_call.1} parent=11 // pred_check
          %p190 = pneg %p105
        $region14: #{tpu_custom_call.1} parent=11 // pred_check_branch
          %192 = sbr.rel (%p190) target = $region16
        $region15: #{tpu_custom_call.1} parent=11 // pred_region
          _
        $region16: #{tpu_custom_call.1} parent=11 // pred_fallthru
          _
        // Predicated region
        $region17: #{tpu_custom_call.1} parent=11 // pred_check
          %p193 = pneg %p126
        $region18: #{tpu_custom_call.1} parent=11 // pred_check_branch
          %195 = sbr.rel (%p193) target = $region20
        $region19: #{tpu_custom_call.1} parent=11 // pred_region
          _
        $region20: #{tpu_custom_call.1} parent=11 // pred_fallthru
          _
        // Predicated region
        $region21: #{tpu_custom_call.1} parent=11 // pred_check
          %p196 = pneg %p147
        $region22: #{tpu_custom_call.1} parent=11 // pred_check_branch
          %198 = sbr.rel (%p196) target = $region24
        $region23: #{tpu_custom_call.1} parent=11 // pred_region
          _
        $region24: #{tpu_custom_call.1} parent=11 // pred_fallthru
          _
      $region12: #{tpu_custom_call.1} parent=5 // pred_fallthru
        _
      %p199 = scmp.lt.s32.totalorder %s14, 2
      // Predicated region
      $region25: #{tpu_custom_call.1} parent=5 // pred_check
        %p200 = pneg %p199
      $region26: #{tpu_custom_call.1} parent=5 // pred_check_branch
        %202 = sbr.rel (%p200) target = $region28
      $region27: #{tpu_custom_call.1} parent=5 // pred_region
        // Predicated region
        $region29: #{tpu_custom_call.1} parent=27 // pred_check
          %p203 = pneg %p48
        $region30: #{tpu_custom_call.1} parent=27 // pred_check_branch
          %205 = sbr.rel (%p203) target = $region32
        $region31: #{tpu_custom_call.1} parent=27 // pred_region
          %s206 = smul.u32 2, %s22
          %p207 = scmp.lt.s32.totalorder %s21, 1
          %s208 = scalar_select %p207, %s21, 1
          %p209 = scmp.lt.s32.totalorder %s206, 3
          %s210 = scalar_select %p209, %s206, 3
          %s211 = smul.addr %s208, 4
          %s212 = sadd.s32 %s210, %s211
          %s213 = smul.addr %s212, 4
          %s214 = scalar_lea.vmem %s0, %s213
          %s215 = smul.u32 2, %s22
        $region32: #{tpu_custom_call.1} parent=27 // pred_fallthru
          _
        // Predicated region
        $region33: #{tpu_custom_call.1} parent=27 // pred_check
          %p216 = pneg %p78
        $region34: #{tpu_custom_call.1} parent=27 // pred_check_branch
          %218 = sbr.rel (%p216) target = $region36
        $region35: #{tpu_custom_call.1} parent=27 // pred_region
          %s219 = sadd.s32 %s22, 1
          %s220 = smul.u32 2, %s219
          %p221 = scmp.lt.s32.totalorder %s21, 1
          %s222 = scalar_select %p221, %s21, 1
          %p223 = scmp.lt.s32.totalorder %s220, 3
          %s224 = scalar_select %p223, %s220, 3
          %s225 = smul.addr %s222, 4
          %s226 = sadd.s32 %s224, %s225
          %s227 = smul.addr %s226, 4
          %s228 = scalar_lea.vmem %s1, %s227
          %s229 = sadd.s32 %s22, 1
          %s230 = smul.u32 2, %s229
        $region36: #{tpu_custom_call.1} parent=27 // pred_fallthru
          _
      $region28: #{tpu_custom_call.1} parent=5 // pred_fallthru
        _
      %p231 = scmp.le.s32.totalorder 1, %s14
      %p232 = scmp.lt.s32.totalorder %s14, 3
      %p233 = pnand %p231, %p232
      %p234 = pneg %p233
      // Predicated region
      $region37: #{tpu_custom_call.1} parent=5 // pred_check
        _
      $region38: #{tpu_custom_call.1} parent=5 // pred_check_branch
        %236 = sbr.rel (%p233) target = $region40
      $region39: #{tpu_custom_call.1} parent=5 // pred_region
        %s237 = ssub.s32 %s14, 1
        %s238 = smul.u32 2, %s24
        %p239 = scmp.lt.s32.totalorder %s23, 1
        %s240 = scalar_select %p239, %s23, 1
        %p241 = scmp.lt.s32.totalorder %s238, 3
        %s242 = scalar_select %p241, %s238, 3
        %s243 = smul.addr %s240, 4
        %s244 = sadd.s32 %s242, %s243
        %s245 = smul.addr %s244, 4
        %s246 = scalar_lea.vmem %s0, %s245
        %p247 = pneg %p54
        %p248 = pneg %p51
        %s249 = sadd.s32 %s24, 1
        %s250 = smul.u32 2, %s249
        %p251 = scmp.lt.s32.totalorder %s23, 1
        %s252 = scalar_select %p251, %s23, 1
        %p253 = scmp.lt.s32.totalorder %s250, 3
        %s254 = scalar_select %p253, %s250, 3
        %s255 = smul.addr %s252, 4
        %s256 = sadd.s32 %s254, %s255
        %s257 = smul.addr %s256, 4
        %s258 = scalar_lea.vmem %s1, %s257
        %p259 = pneg %p84
        %p260 = pneg %p81
        %p261 = pneg %p105
        %p262 = pneg %p102
        %p263 = pneg %p126
        %p264 = pneg %p123
        %p265 = pneg %p147
        %p266 = pneg %p144
        %p267 = pneg %p175
        %p268 = pneg %p172
        %s269 = sand.u32 %s162, 1
        %s270 = scalar_lea.sflag [#allocation3], %s269
        %s271 = sand.u32 %s162, 1
        %s272 = smul.addr %s271, 16
        %s273 = scalar_lea.vmem [#allocation2], %s272
        %s274 = smul.u32 2, %s24
        %p275 = scmp.lt.s32.totalorder %s23, 1
        %s276 = scalar_select %p275, %s23, 1
        %p277 = scmp.lt.s32.totalorder %s274, 3
        %s278 = scalar_select %p277, %s274, 3
        %s279 = smul.addr %s276, 4
        %s280 = sadd.s32 %s278, %s279
        %s281 = smul.addr %s280, 4
        %s282 = scalar_lea.vmem %s0, %s281
        %s283 = smul.u32 2, %s24
        %s284 = sadd.s32 %s24, 1
        %s285 = smul.u32 2, %s284
        %p286 = scmp.lt.s32.totalorder %s23, 1
        %s287 = scalar_select %p286, %s23, 1
        %p288 = scmp.lt.s32.totalorder %s285, 3
        %s289 = scalar_select %p288, %s285, 3
        %s290 = smul.addr %s287, 4
        %s291 = sadd.s32 %s289, %s290
        %s292 = smul.addr %s291, 4
        %s293 = scalar_lea.vmem %s1, %s292
        %s294 = sadd.s32 %s24, 1
        %s295 = smul.u32 2, %s294
        %s296 = smul.u32 2, %s24
        %v298 = vld [vmem:[%s282] sm:$0xff]
        %v299 = vld [vmem:[%s293] sm:$0xff]
        %v301 = vunpack.c.l.b16 %v298
        %v302 = vunpack.c.h.b16 %v298
        %v303 = vpack.c.b16 %v301, %v301
        %v304 = vpack.c.b16 %v302, %v302
        %v306 = vunpack.c.l.b16 %v299
        %v307 = vpack.c.b16 %v306, %v306
        %v308 = vld [vmem:[%s2] sm:$0xf]
        %v309 = vld [vmem:[%s2 + $0x4] sm:$0xf]
        %s310 = scalar_lea.vmem %s2, 8
        %v311 = vld [vmem:[%s310] sm:$0xf]
        %v312 = vld [vmem:[%s310 + $0x4] sm:$0xf]
        %v315 = vunpack.c.l.b16 %v311
        %v316 = vunpack.c.l.b16 %v312
        %v317 = vpack.c.b16 %v316, %v315
        %318 = vrot.lane.b32.xlu0 %v303, 127
        %v319 = vpop.permute.xlu0 %318
        %320 = vrot.lane.b32.xlu0 %v304, 127
        %v321 = vpop.permute.xlu0 %320
        %322 = vrot.lane.b32.xlu0 %v307, 127
        %v323 = vpop.permute.xlu0 %322
        %vm324 = vcmask 1039360
        %v325 = vsel %vm324, %v319, %v321
        %v326 = vsel %vm324, %v321, %v323
        %vm327 = vcmask 64512
        %v329 = vsel %vm327, %v317, 0
        %vm331 = vcmask 1043456
        %v333 = vsel %vm331, %v325, 0
        %v336 = vsel %vm331, %v326, 0
        %338 = vmatprep.subr.bf16.mxu0 %v336
        %339 = vmatpush1.bf16.msra.mxu0 %v333
        %340 = vmatprep.subr.bf16.mxu0 0
        %341 = vmatpush1.bf16.msra.mxu0 0
        %342 = vmatprep.subr.bf16.mxu0 0
        %343 = vmatpush1.bf16.msra.mxu0 0
        %344 = vmatprep.subr.bf16.mxu0 0
        %345 = vmatpush1.bf16.msra.mxu0 0
        %346 = vmatprep.subr.bf16.mxu0 0
        %347 = vmatpush1.bf16.msra.mxu0 0
        %348 = vmatprep.subr.bf16.mxu0 0
        %349 = vmatpush1.bf16.msra.mxu0 0
        %350 = vmatprep.subr.bf16.mxu0 0
        %351 = vmatpush1.bf16.msra.mxu0 0
        %352 = vmatprep.subr.bf16.mxu0 0
        %353 = vmatpush1.bf16.msra.mxu0 0
        %354 = vmatprep.subr.bf16.mxu0 0
        %355 = vmatpush1.bf16.msra.mxu0 0
        %356 = vmatprep.subr.bf16.mxu0 0
        %357 = vmatpush1.bf16.msra.mxu0 0
        %358 = vmatprep.subr.bf16.mxu0 0
        %359 = vmatpush1.bf16.msra.mxu0 0
        %360 = vmatprep.subr.bf16.mxu0 0
        %361 = vmatpush1.bf16.msra.mxu0 0
        %362 = vmatprep.subr.bf16.mxu0 0
        %363 = vmatpush1.bf16.msra.mxu0 0
        %364 = vmatprep.subr.bf16.mxu0 0
        %365 = vmatpush1.bf16.msra.mxu0 0
        %366 = vmatprep.subr.bf16.mxu0 0
        %367 = vmatpush1.bf16.msra.mxu0 0
        %368 = vmatprep.subr.bf16.mxu0 0
        %369 = vmatpush1.bf16.msra.mxu0 0
        %370 = vmatprep.mubr.bf16.mxu0 0
        %371 = vmatmul.mubr.bf16.gmra.mrb[0].mxu0 %v329
        %v372 = vpop.f32.mrb[0].mxu0
        %v373 = vadd.f32 0.0, %v372
        %v374 = vpop.f32.mrb[0].mxu0
        %v375 = vadd.f32 0.0, %v374
        %v376 = vpop.f32.mrb[0].mxu0
        %v377 = vadd.f32 0.0, %v376
        %v378 = vpop.f32.mrb[0].mxu0
        %v379 = vadd.f32 0.0, %v378
        %380 = vdwg.mxu0
        %v383 = vunpack.c.l.b16 %v308
        %v384 = vunpack.c.l.b16 %v309
        %v385 = vpack.c.b16 %v384, %v383
        %v387 = vsel %vm327, %v385, 0
        %v390 = vsel %vm331, %v303, 0
        %v393 = vsel %vm331, %v304, 0
        %395 = vmatprep.subr.bf16.mxu0 %v393
        %396 = vmatpush1.bf16.msra.mxu0 %v390
        %397 = vmatprep.subr.bf16.mxu0 0
        %398 = vmatpush1.bf16.msra.mxu0 0
        %399 = vmatprep.subr.bf16.mxu0 0
        %400 = vmatpush1.bf16.msra.mxu0 0
        %401 = vmatprep.subr.bf16.mxu0 0
        %402 = vmatpush1.bf16.msra.mxu0 0
        %403 = vmatprep.subr.bf16.mxu0 0
        %404 = vmatpush1.bf16.msra.mxu0 0
        %405 = vmatprep.subr.bf16.mxu0 0
        %406 = vmatpush1.bf16.msra.mxu0 0
        %407 = vmatprep.subr.bf16.mxu0 0
        %408 = vmatpush1.bf16.msra.mxu0 0
        %409 = vmatprep.subr.bf16.mxu0 0
        %410 = vmatpush1.bf16.msra.mxu0 0
        %411 = vmatprep.subr.bf16.mxu0 0
        %412 = vmatpush1.bf16.msra.mxu0 0
        %413 = vmatprep.subr.bf16.mxu0 0
        %414 = vmatpush1.bf16.msra.mxu0 0
        %415 = vmatprep.subr.bf16.mxu0 0
        %416 = vmatpush1.bf16.msra.mxu0 0
        %417 = vmatprep.subr.bf16.mxu0 0
        %418 = vmatpush1.bf16.msra.mxu0 0
        %419 = vmatprep.subr.bf16.mxu0 0
        %420 = vmatpush1.bf16.msra.mxu0 0
        %421 = vmatprep.subr.bf16.mxu0 0
        %422 = vmatpush1.bf16.msra.mxu0 0
        %423 = vmatprep.subr.bf16.mxu0 0
        %424 = vmatpush1.bf16.msra.mxu0 0
        %425 = vmatprep.subr.bf16.mxu0 0
        %426 = vmatpush1.bf16.msra.mxu0 0
        %427 = vmatprep.mubr.bf16.mxu0 0
        %428 = vmatmul.mubr.bf16.gmra.mrb[0].mxu0 %v387
        %v429 = vpop.f32.mrb[0].mxu0
        %v430 = vadd.f32 %v373, %v429
        %v431 = vpop.f32.mrb[0].mxu0
        %v432 = vadd.f32 %v375, %v431
        %v433 = vpop.f32.mrb[0].mxu0
        %v434 = vadd.f32 %v377, %v433
        %v435 = vpop.f32.mrb[0].mxu0
        %v436 = vadd.f32 %v379, %v435
        %437 = vdwg.mxu0
        %s438 = scalar_lea.vmem %s2, 16
        %v439 = vld [vmem:[%s438] sm:$0xf]
        %v440 = vld [vmem:[%s438 + $0x4] sm:$0xf]
        %v443 = vunpack.c.l.b16 %v439
        %v444 = vunpack.c.l.b16 %v440
        %v445 = vpack.c.b16 %v444, %v443
        %446 = vrot.lane.b32.xlu0 %v303, 126
        %v447 = vpop.permute.xlu0 %446
        %448 = vrot.lane.b32.xlu0 %v304, 126
        %v449 = vpop.permute.xlu0 %448
        %450 = vrot.lane.b32.xlu0 %v307, 126
        %v451 = vpop.permute.xlu0 %450
        %vm452 = vcmask 1031168
        %v453 = vsel %vm452, %v447, %v449
        %v454 = vsel %vm452, %v449, %v451
        %v456 = vsel %vm327, %v445, 0
        %v459 = vsel %vm331, %v453, 0
        %v462 = vsel %vm331, %v454, 0
        %464 = vmatprep.subr.bf16.mxu0 %v462
        %465 = vmatpush1.bf16.msra.mxu0 %v459
        %466 = vmatprep.subr.bf16.mxu0 0
        %467 = vmatpush1.bf16.msra.mxu0 0
        %468 = vmatprep.subr.bf16.mxu0 0
        %469 = vmatpush1.bf16.msra.mxu0 0
        %470 = vmatprep.subr.bf16.mxu0 0
        %471 = vmatpush1.bf16.msra.mxu0 0
        %472 = vmatprep.subr.bf16.mxu0 0
        %473 = vmatpush1.bf16.msra.mxu0 0
        %474 = vmatprep.subr.bf16.mxu0 0
        %475 = vmatpush1.bf16.msra.mxu0 0
        %476 = vmatprep.subr.bf16.mxu0 0
        %477 = vmatpush1.bf16.msra.mxu0 0
        %478 = vmatprep.subr.bf16.mxu0 0
        %479 = vmatpush1.bf16.msra.mxu0 0
        %480 = vmatprep.subr.bf16.mxu0 0
        %481 = vmatpush1.bf16.msra.mxu0 0
        %482 = vmatprep.subr.bf16.mxu0 0
        %483 = vmatpush1.bf16.msra.mxu0 0
        %484 = vmatprep.subr.bf16.mxu0 0
        %485 = vmatpush1.bf16.msra.mxu0 0
        %486 = vmatprep.subr.bf16.mxu0 0
        %487 = vmatpush1.bf16.msra.mxu0 0
        %488 = vmatprep.subr.bf16.mxu0 0
        %489 = vmatpush1.bf16.msra.mxu0 0
        %490 = vmatprep.subr.bf16.mxu0 0
        %491 = vmatpush1.bf16.msra.mxu0 0
        %492 = vmatprep.subr.bf16.mxu0 0
        %493 = vmatpush1.bf16.msra.mxu0 0
        %494 = vmatprep.subr.bf16.mxu0 0
        %495 = vmatpush1.bf16.msra.mxu0 0
        %496 = vmatprep.mubr.bf16.mxu0 0
        %497 = vmatmul.mubr.bf16.gmra.mrb[0].mxu0 %v456
        %v498 = vpop.f32.mrb[0].mxu0
        %v499 = vadd.f32 0.0, %v498
        %v500 = vpop.f32.mrb[0].mxu0
        %v501 = vadd.f32 0.0, %v500
        %v502 = vpop.f32.mrb[0].mxu0
        %v503 = vadd.f32 0.0, %v502
        %v504 = vpop.f32.mrb[0].mxu0
        %v505 = vadd.f32 0.0, %v504
        %506 = vdwg.mxu0
        %v507 = vadd.f32 %v430, %v499
        %v508 = vadd.f32 %v432, %v501
        %v509 = vadd.f32 %v434, %v503
        %v510 = vadd.f32 %v436, %v505
        %s511 = scalar_lea.vmem %s2, 24
        %v512 = vld [vmem:[%s511] sm:$0xf]
        %v513 = vld [vmem:[%s511 + $0x4] sm:$0xf]
        %v516 = vunpack.c.l.b16 %v512
        %v517 = vunpack.c.l.b16 %v513
        %v518 = vpack.c.b16 %v517, %v516
        %519 = vrot.lane.b32.xlu0 %v303, 115
        %v520 = vpop.permute.xlu0 %519
        %521 = vrot.lane.b32.xlu0 %v304, 115
        %v522 = vpop.permute.xlu0 %521
        %523 = vrot.lane.b32.xlu0 %v307, 115
        %v524 = vpop.permute.xlu0 %523
        %vm525 = vcmask 941056
        %v526 = vsel %vm525, %v520, %v522
        %v527 = vsel %vm525, %v522, %v524
        %v529 = vsel %vm327, %v518, 0
        %v532 = vsel %vm331, %v526, 0
        %v535 = vsel %vm331, %v527, 0
        %537 = vmatprep.subr.bf16.mxu0 %v535
        %538 = vmatpush1.bf16.msra.mxu0 %v532
        %539 = vmatprep.subr.bf16.mxu0 0
        %540 = vmatpush1.bf16.msra.mxu0 0
        %541 = vmatprep.subr.bf16.mxu0 0
        %542 = vmatpush1.bf16.msra.mxu0 0
        %543 = vmatprep.subr.bf16.mxu0 0
        %544 = vmatpush1.bf16.msra.mxu0 0
        %545 = vmatprep.subr.bf16.mxu0 0
        %546 = vmatpush1.bf16.msra.mxu0 0
        %547 = vmatprep.subr.bf16.mxu0 0
        %548 = vmatpush1.bf16.msra.mxu0 0
        %549 = vmatprep.subr.bf16.mxu0 0
        %550 = vmatpush1.bf16.msra.mxu0 0
        %551 = vmatprep.subr.bf16.mxu0 0
        %552 = vmatpush1.bf16.msra.mxu0 0
        %553 = vmatprep.subr.bf16.mxu0 0
        %554 = vmatpush1.bf16.msra.mxu0 0
        %555 = vmatprep.subr.bf16.mxu0 0
        %556 = vmatpush1.bf16.msra.mxu0 0
        %557 = vmatprep.subr.bf16.mxu0 0
        %558 = vmatpush1.bf16.msra.mxu0 0
        %559 = vmatprep.subr.bf16.mxu0 0
        %560 = vmatpush1.bf16.msra.mxu0 0
        %561 = vmatprep.subr.bf16.mxu0 0
        %562 = vmatpush1.bf16.msra.mxu0 0
        %563 = vmatprep.subr.bf16.mxu0 0
        %564 = vmatpush1.bf16.msra.mxu0 0
        %565 = vmatprep.subr.bf16.mxu0 0
        %566 = vmatpush1.bf16.msra.mxu0 0
        %567 = vmatprep.subr.bf16.mxu0 0
        %568 = vmatpush1.bf16.msra.mxu0 0
        %569 = vmatprep.mubr.bf16.mxu0 0
        %570 = vmatmul.mubr.bf16.gmra.mrb[0].mxu0 %v529
        %v571 = vpop.f32.mrb[0].mxu0
        %v572 = vadd.f32 0.0, %v571
        %v573 = vpop.f32.mrb[0].mxu0
        %v574 = vadd.f32 0.0, %v573
        %v575 = vpop.f32.mrb[0].mxu0
        %v576 = vadd.f32 0.0, %v575
        %v577 = vpop.f32.mrb[0].mxu0
        %v578 = vadd.f32 0.0, %v577
        %579 = vdwg.mxu0
        %v580 = vadd.f32 %v507, %v572
        %v581 = vadd.f32 %v508, %v574
        %v582 = vadd.f32 %v509, %v576
        %v583 = vadd.f32 %v510, %v578
        %s584 = scalar_lea.vmem %s2, 32
        %v585 = vld [vmem:[%s584] sm:$0xf]
        %v586 = vld [vmem:[%s584 + $0x4] sm:$0xf]
        %v589 = vunpack.c.l.b16 %v585
        %v590 = vunpack.c.l.b16 %v586
        %v591 = vpack.c.b16 %v590, %v589
        %592 = vrot.lane.b32.xlu0 %v303, 114
        %v593 = vpop.permute.xlu0 %592
        %594 = vrot.lane.b32.xlu0 %v304, 114
        %v595 = vpop.permute.xlu0 %594
        %596 = vrot.lane.b32.xlu0 %v307, 114
        %v597 = vpop.permute.xlu0 %596
        %vm598 = vcmask 932864
        %v599 = vsel %vm598, %v593, %v595
        %v600 = vsel %vm598, %v595, %v597
        %v602 = vsel %vm327, %v591, 0
        %v605 = vsel %vm331, %v599, 0
        %v608 = vsel %vm331, %v600, 0
        %610 = vmatprep.subr.bf16.mxu0 %v608
        %611 = vmatpush1.bf16.msra.mxu0 %v605
        %612 = vmatprep.subr.bf16.mxu0 0
        %613 = vmatpush1.bf16.msra.mxu0 0
        %614 = vmatprep.subr.bf16.mxu0 0
        %615 = vmatpush1.bf16.msra.mxu0 0
        %616 = vmatprep.subr.bf16.mxu0 0
        %617 = vmatpush1.bf16.msra.mxu0 0
        %618 = vmatprep.subr.bf16.mxu0 0
        %619 = vmatpush1.bf16.msra.mxu0 0
        %620 = vmatprep.subr.bf16.mxu0 0
        %621 = vmatpush1.bf16.msra.mxu0 0
        %622 = vmatprep.subr.bf16.mxu0 0
        %623 = vmatpush1.bf16.msra.mxu0 0
        %624 = vmatprep.subr.bf16.mxu0 0
        %625 = vmatpush1.bf16.msra.mxu0 0
        %626 = vmatprep.subr.bf16.mxu0 0
        %627 = vmatpush1.bf16.msra.mxu0 0
        %628 = vmatprep.subr.bf16.mxu0 0
        %629 = vmatpush1.bf16.msra.mxu0 0
        %630 = vmatprep.subr.bf16.mxu0 0
        %631 = vmatpush1.bf16.msra.mxu0 0
        %632 = vmatprep.subr.bf16.mxu0 0
        %633 = vmatpush1.bf16.msra.mxu0 0
        %634 = vmatprep.subr.bf16.mxu0 0
        %635 = vmatpush1.bf16.msra.mxu0 0
        %636 = vmatprep.subr.bf16.mxu0 0
        %637 = vmatpush1.bf16.msra.mxu0 0
        %638 = vmatprep.subr.bf16.mxu0 0
        %639 = vmatpush1.bf16.msra.mxu0 0
        %640 = vmatprep.subr.bf16.mxu0 0
        %641 = vmatpush1.bf16.msra.mxu0 0
        %642 = vmatprep.mubr.bf16.mxu0 0
        %643 = vmatmul.mubr.bf16.gmra.mrb[0].mxu0 %v602
        %v644 = vpop.f32.mrb[0].mxu0
        %v645 = vadd.f32 0.0, %v644
        %v646 = vpop.f32.mrb[0].mxu0
        %v647 = vadd.f32 0.0, %v646
        %v648 = vpop.f32.mrb[0].mxu0
        %v649 = vadd.f32 0.0, %v648
        %v650 = vpop.f32.mrb[0].mxu0
        %v651 = vadd.f32 0.0, %v650
        %652 = vdwg.mxu0
        %v653 = vadd.f32 %v580, %v645
        %v654 = vadd.f32 %v581, %v647
        %v655 = vadd.f32 %v582, %v649
        %v656 = vadd.f32 %v583, %v651
        %s657 = scalar_lea.vmem %s2, 40
        %v658 = vld [vmem:[%s657] sm:$0xf]
        %v659 = vld [vmem:[%s657 + $0x4] sm:$0xf]
        %v662 = vunpack.c.l.b16 %v658
        %v663 = vunpack.c.l.b16 %v659
        %v664 = vpack.c.b16 %v663, %v662
        %665 = vrot.lane.b32.xlu0 %v303, 113
        %v666 = vpop.permute.xlu0 %665
        %667 = vrot.lane.b32.xlu0 %v304, 113
        %v668 = vpop.permute.xlu0 %667
        %669 = vrot.lane.b32.xlu0 %v307, 113
        %v670 = vpop.permute.xlu0 %669
        %vm671 = vcmask 924672
        %v672 = vsel %vm671, %v666, %v668
        %v673 = vsel %vm671, %v668, %v670
        %v675 = vsel %vm327, %v664, 0
        %v678 = vsel %vm331, %v672, 0
        %v681 = vsel %vm331, %v673, 0
        %683 = vmatprep.subr.bf16.mxu0 %v681
        %684 = vmatpush1.bf16.msra.mxu0 %v678
        %685 = vmatprep.subr.bf16.mxu0 0
        %686 = vmatpush1.bf16.msra.mxu0 0
        %687 = vmatprep.subr.bf16.mxu0 0
        %688 = vmatpush1.bf16.msra.mxu0 0
        %689 = vmatprep.subr.bf16.mxu0 0
        %690 = vmatpush1.bf16.msra.mxu0 0
        %691 = vmatprep.subr.bf16.mxu0 0
        %692 = vmatpush1.bf16.msra.mxu0 0
        %693 = vmatprep.subr.bf16.mxu0 0
        %694 = vmatpush1.bf16.msra.mxu0 0
        %695 = vmatprep.subr.bf16.mxu0 0
        %696 = vmatpush1.bf16.msra.mxu0 0
        %697 = vmatprep.subr.bf16.mxu0 0
        %698 = vmatpush1.bf16.msra.mxu0 0
        %699 = vmatprep.subr.bf16.mxu0 0
        %700 = vmatpush1.bf16.msra.mxu0 0
        %701 = vmatprep.subr.bf16.mxu0 0
        %702 = vmatpush1.bf16.msra.mxu0 0
        %703 = vmatprep.subr.bf16.mxu0 0
        %704 = vmatpush1.bf16.msra.mxu0 0
        %705 = vmatprep.subr.bf16.mxu0 0
        %706 = vmatpush1.bf16.msra.mxu0 0
        %707 = vmatprep.subr.bf16.mxu0 0
        %708 = vmatpush1.bf16.msra.mxu0 0
        %709 = vmatprep.subr.bf16.mxu0 0
        %710 = vmatpush1.bf16.msra.mxu0 0
        %711 = vmatprep.subr.bf16.mxu0 0
        %712 = vmatpush1.bf16.msra.mxu0 0
        %713 = vmatprep.subr.bf16.mxu0 0
        %714 = vmatpush1.bf16.msra.mxu0 0
        %715 = vmatprep.mubr.bf16.mxu0 0
        %716 = vmatmul.mubr.bf16.gmra.mrb[0].mxu0 %v675
        %v717 = vpop.f32.mrb[0].mxu0
        %v718 = vadd.f32 0.0, %v717
        %v719 = vpop.f32.mrb[0].mxu0
        %v720 = vadd.f32 0.0, %v719
        %v721 = vpop.f32.mrb[0].mxu0
        %v722 = vadd.f32 0.0, %v721
        %v723 = vpop.f32.mrb[0].mxu0
        %v724 = vadd.f32 0.0, %v723
        %725 = vdwg.mxu0
        %v726 = vadd.f32 %v653, %v718
        %v727 = vadd.f32 %v654, %v720
        %v728 = vadd.f32 %v655, %v722
        %v729 = vadd.f32 %v656, %v724
        %s730 = scalar_lea.vmem %s2, 48
        %v731 = vld [vmem:[%s730] sm:$0xf]
        %v732 = vld [vmem:[%s730 + $0x4] sm:$0xf]
        %v735 = vunpack.c.l.b16 %v731
        %v736 = vunpack.c.l.b16 %v732
        %v737 = vpack.c.b16 %v736, %v735
        %738 = vrot.lane.b32.xlu0 %v303, 102
        %v739 = vpop.permute.xlu0 %738
        %740 = vrot.lane.b32.xlu0 %v304, 102
        %v741 = vpop.permute.xlu0 %740
        %742 = vrot.lane.b32.xlu0 %v307, 102
        %v743 = vpop.permute.xlu0 %742
        %vm744 = vcmask 834560
        %v745 = vsel %vm744, %v739, %v741
        %v746 = vsel %vm744, %v741, %v743
        %v748 = vsel %vm327, %v737, 0
        %v751 = vsel %vm331, %v745, 0
        %v754 = vsel %vm331, %v746, 0
        %756 = vmatprep.subr.bf16.mxu0 %v754
        %757 = vmatpush1.bf16.msra.mxu0 %v751
        %758 = vmatprep.subr.bf16.mxu0 0
        %759 = vmatpush1.bf16.msra.mxu0 0
        %760 = vmatprep.subr.bf16.mxu0 0
        %761 = vmatpush1.bf16.msra.mxu0 0
        %762 = vmatprep.subr.bf16.mxu0 0
        %763 = vmatpush1.bf16.msra.mxu0 0
        %764 = vmatprep.subr.bf16.mxu0 0
        %765 = vmatpush1.bf16.msra.mxu0 0
        %766 = vmatprep.subr.bf16.mxu0 0
        %767 = vmatpush1.bf16.msra.mxu0 0
        %768 = vmatprep.subr.bf16.mxu0 0
        %769 = vmatpush1.bf16.msra.mxu0 0
        %770 = vmatprep.subr.bf16.mxu0 0
        %771 = vmatpush1.bf16.msra.mxu0 0
        %772 = vmatprep.subr.bf16.mxu0 0
        %773 = vmatpush1.bf16.msra.mxu0 0
        %774 = vmatprep.subr.bf16.mxu0 0
        %775 = vmatpush1.bf16.msra.mxu0 0
        %776 = vmatprep.subr.bf16.mxu0 0
        %777 = vmatpush1.bf16.msra.mxu0 0
        %778 = vmatprep.subr.bf16.mxu0 0
        %779 = vmatpush1.bf16.msra.mxu0 0
        %780 = vmatprep.subr.bf16.mxu0 0
        %781 = vmatpush1.bf16.msra.mxu0 0
        %782 = vmatprep.subr.bf16.mxu0 0
        %783 = vmatpush1.bf16.msra.mxu0 0
        %784 = vmatprep.subr.bf16.mxu0 0
        %785 = vmatpush1.bf16.msra.mxu0 0
        %786 = vmatprep.subr.bf16.mxu0 0
        %787 = vmatpush1.bf16.msra.mxu0 0
        %788 = vmatprep.mubr.bf16.mxu0 0
        %789 = vmatmul.mubr.bf16.gmra.mrb[0].mxu0 %v748
        %v790 = vpop.f32.mrb[0].mxu0
        %v791 = vadd.f32 0.0, %v790
        %v792 = vpop.f32.mrb[0].mxu0
        %v793 = vadd.f32 0.0, %v792
        %v794 = vpop.f32.mrb[0].mxu0
        %v795 = vadd.f32 0.0, %v794
        %v796 = vpop.f32.mrb[0].mxu0
        %v797 = vadd.f32 0.0, %v796
        %798 = vdwg.mxu0
        %v799 = vadd.f32 %v726, %v791
        %v800 = vadd.f32 %v727, %v793
        %v801 = vadd.f32 %v728, %v795
        %v802 = vadd.f32 %v729, %v797
        %s803 = scalar_lea.vmem %s2, 56
        %v804 = vld [vmem:[%s803] sm:$0xf]
        %v805 = vld [vmem:[%s803 + $0x4] sm:$0xf]
        %v808 = vunpack.c.l.b16 %v804
        %v809 = vunpack.c.l.b16 %v805
        %v810 = vpack.c.b16 %v809, %v808
        %811 = vrot.lane.b32.xlu0 %v303, 101
        %v812 = vpop.permute.xlu0 %811
        %813 = vrot.lane.b32.xlu0 %v304, 101
        %v814 = vpop.permute.xlu0 %813
        %815 = vrot.lane.b32.xlu0 %v307, 101
        %v816 = vpop.permute.xlu0 %815
        %vm817 = vcmask 826368
        %v818 = vsel %vm817, %v812, %v814
        %v819 = vsel %vm817, %v814, %v816
        %v821 = vsel %vm327, %v810, 0
        %v824 = vsel %vm331, %v818, 0
        %v827 = vsel %vm331, %v819, 0
        %829 = vmatprep.subr.bf16.mxu0 %v827
        %830 = vmatpush1.bf16.msra.mxu0 %v824
        %831 = vmatprep.subr.bf16.mxu0 0
        %832 = vmatpush1.bf16.msra.mxu0 0
        %833 = vmatprep.subr.bf16.mxu0 0
        %834 = vmatpush1.bf16.msra.mxu0 0
        %835 = vmatprep.subr.bf16.mxu0 0
        %836 = vmatpush1.bf16.msra.mxu0 0
        %837 = vmatprep.subr.bf16.mxu0 0
        %838 = vmatpush1.bf16.msra.mxu0 0
        %839 = vmatprep.subr.bf16.mxu0 0
        %840 = vmatpush1.bf16.msra.mxu0 0
        %841 = vmatprep.subr.bf16.mxu0 0
        %842 = vmatpush1.bf16.msra.mxu0 0
        %843 = vmatprep.subr.bf16.mxu0 0
        %844 = vmatpush1.bf16.msra.mxu0 0
        %845 = vmatprep.subr.bf16.mxu0 0
        %846 = vmatpush1.bf16.msra.mxu0 0
        %847 = vmatprep.subr.bf16.mxu0 0
        %848 = vmatpush1.bf16.msra.mxu0 0
        %849 = vmatprep.subr.bf16.mxu0 0
        %850 = vmatpush1.bf16.msra.mxu0 0
        %851 = vmatprep.subr.bf16.mxu0 0
        %852 = vmatpush1.bf16.msra.mxu0 0
        %853 = vmatprep.subr.bf16.mxu0 0
        %854 = vmatpush1.bf16.msra.mxu0 0
        %855 = vmatprep.subr.bf16.mxu0 0
        %856 = vmatpush1.bf16.msra.mxu0 0
        %857 = vmatprep.subr.bf16.mxu0 0
        %858 = vmatpush1.bf16.msra.mxu0 0
        %859 = vmatprep.subr.bf16.mxu0 0
        %860 = vmatpush1.bf16.msra.mxu0 0
        %861 = vmatprep.mubr.bf16.mxu0 0
        %862 = vmatmul.mubr.bf16.gmra.mrb[0].mxu0 %v821
        %v863 = vpop.f32.mrb[0].mxu0
        %v864 = vadd.f32 0.0, %v863
        %v865 = vpop.f32.mrb[0].mxu0
        %v866 = vadd.f32 0.0, %v865
        %v867 = vpop.f32.mrb[0].mxu0
        %v868 = vadd.f32 0.0, %v867
        %v869 = vpop.f32.mrb[0].mxu0
        %v870 = vadd.f32 0.0, %v869
        %871 = vdwg.mxu0
        %v872 = vadd.f32 %v799, %v864
        %v873 = vadd.f32 %v800, %v866
        %v874 = vadd.f32 %v801, %v868
        %v875 = vadd.f32 %v802, %v870
        %s876 = scalar_lea.vmem %s2, 64
        %v877 = vld [vmem:[%s876] sm:$0xf]
        %v878 = vld [vmem:[%s876 + $0x4] sm:$0xf]
        %v881 = vunpack.c.l.b16 %v877
        %v882 = vunpack.c.l.b16 %v878
        %v883 = vpack.c.b16 %v882, %v881
        %884 = vrot.lane.b32.xlu0 %v303, 100
        %v885 = vpop.permute.xlu0 %884
        %886 = vrot.lane.b32.xlu0 %v304, 100
        %v887 = vpop.permute.xlu0 %886
        %888 = vrot.lane.b32.xlu0 %v307, 100
        %v889 = vpop.permute.xlu0 %888
        %vm890 = vcmask 818176
        %v891 = vsel %vm890, %v885, %v887
        %v892 = vsel %vm890, %v887, %v889
        %v894 = vsel %vm327, %v883, 0
        %v897 = vsel %vm331, %v891, 0
        %v900 = vsel %vm331, %v892, 0
        %902 = vmatprep.subr.bf16.mxu0 %v900
        %903 = vmatpush1.bf16.msra.mxu0 %v897
        %904 = vmatprep.subr.bf16.mxu0 0
        %905 = vmatpush1.bf16.msra.mxu0 0
        %906 = vmatprep.subr.bf16.mxu0 0
        %907 = vmatpush1.bf16.msra.mxu0 0
        %908 = vmatprep.subr.bf16.mxu0 0
        %909 = vmatpush1.bf16.msra.mxu0 0
        %910 = vmatprep.subr.bf16.mxu0 0
        %911 = vmatpush1.bf16.msra.mxu0 0
        %912 = vmatprep.subr.bf16.mxu0 0
        %913 = vmatpush1.bf16.msra.mxu0 0
        %914 = vmatprep.subr.bf16.mxu0 0
        %915 = vmatpush1.bf16.msra.mxu0 0
        %916 = vmatprep.subr.bf16.mxu0 0
        %917 = vmatpush1.bf16.msra.mxu0 0
        %918 = vmatprep.subr.bf16.mxu0 0
        %919 = vmatpush1.bf16.msra.mxu0 0
        %920 = vmatprep.subr.bf16.mxu0 0
        %921 = vmatpush1.bf16.msra.mxu0 0
        %922 = vmatprep.subr.bf16.mxu0 0
        %923 = vmatpush1.bf16.msra.mxu0 0
        %924 = vmatprep.subr.bf16.mxu0 0
        %925 = vmatpush1.bf16.msra.mxu0 0
        %926 = vmatprep.subr.bf16.mxu0 0
        %927 = vmatpush1.bf16.msra.mxu0 0
        %928 = vmatprep.subr.bf16.mxu0 0
        %929 = vmatpush1.bf16.msra.mxu0 0
        %930 = vmatprep.subr.bf16.mxu0 0
        %931 = vmatpush1.bf16.msra.mxu0 0
        %932 = vmatprep.subr.bf16.mxu0 0
        %933 = vmatpush1.bf16.msra.mxu0 0
        %934 = vmatprep.mubr.bf16.mxu0 0
        %935 = vmatmul.mubr.bf16.gmra.mrb[0].mxu0 %v894
        %v936 = vpop.f32.mrb[0].mxu0
        %v937 = vadd.f32 0.0, %v936
        %v938 = vpop.f32.mrb[0].mxu0
        %v939 = vadd.f32 0.0, %v938
        %v940 = vpop.f32.mrb[0].mxu0
        %v941 = vadd.f32 0.0, %v940
        %v942 = vpop.f32.mrb[0].mxu0
        %v943 = vadd.f32 0.0, %v942
        %944 = vdwg.mxu0
        %v945 = vadd.f32 %v872, %v937
        %v946 = vadd.f32 %v873, %v939
        %v947 = vadd.f32 %v874, %v941
        %v948 = vadd.f32 %v875, %v943
        %v949 = vld [vmem:[%s3] sm:$0xff]
        %v950 = vld [vmem:[%s3 + $0x8] sm:$0xff]
        %952 = vset.pattern.permute.xlu0 0
        %953 = vperm.xlu0 %952, %v949
        %v954 = vpop.permute.xlu0 %953
        %957 = vset.pattern.permute.xlu0 0
        %958 = vperm.xlu0 %957, %v950
        %v959 = vpop.permute.xlu0 %958
        %v961 = vadd.f32 %v945, %v954
        %v962 = vadd.f32 %v946, %v954
        %v963 = vadd.f32 %v947, %v959
        %v964 = vadd.f32 %v948, %v959
        %vm965 = vcmp.ge.f32.partialorder %v961, 0.0
        %vm966 = vcmp.ge.f32.partialorder %v962, 0.0
        %vm967 = vcmp.ge.f32.partialorder %v963, 0.0
        %vm968 = vcmp.ge.f32.partialorder %v964, 0.0
        %v969 = vld [vmem:[%s4] sm:$0xff]
        %v970 = vld [vmem:[%s4 + $0x8] sm:$0xff]
        %972 = vset.pattern.permute.xlu0 0
        %973 = vperm.xlu0 %972, %v969
        %v974 = vpop.permute.xlu0 %973
        %977 = vset.pattern.permute.xlu0 0
        %978 = vperm.xlu0 %977, %v970
        %v979 = vpop.permute.xlu0 %978
        %v981 = vmul.f32 %v961, %v974
        %v982 = vmul.f32 %v962, %v974
        %v983 = vmul.f32 %v963, %v979
        %v984 = vmul.f32 %v964, %v979
        %v985 = vsel %vm965, %v961, %v981
        %v986 = vsel %vm966, %v962, %v982
        %v987 = vsel %vm967, %v963, %v983
        %v988 = vsel %vm968, %v964, %v984
        %v989 = vpack.c.bf16 %v987, %v985
        %v990 = vpack.c.bf16 %v988, %v986
        %v993 = vunpack.c.l.b16 %v989
        %v994 = vunpack.c.l.b16 %v990
        %v995 = vunpack.c.h.b16 %v989
        %v996 = vunpack.c.h.b16 %v990
        %v997 = vpack.c.b16 %v994, %v993
        %v998 = vpack.c.b16 %v996, %v995
        %1001 = vst [vmem:[%s273] sm:$0xff] %v997
        %1002 = vst [vmem:[%s273 + $0x8] sm:$0xff] %v998
        %s1003 = sand.u32 %s162, 1
        %s1004 = scalar_lea.sflag [#allocation3], %s1003
        %s1005 = sand.u32 %s162, 1
        %s1006 = smul.addr %s1005, 16
        %s1007 = scalar_lea.vmem [#allocation2], %s1006
        // Predicated region
        $region41: #{tpu_custom_call.1} parent=39 // pred_check
          %p1008 = pneg %p172
        $region42: #{tpu_custom_call.1} parent=39 // pred_check_branch
          %1010 = sbr.rel (%p1008) target = $region44
        $region43: #{tpu_custom_call.1} parent=39 // pred_region
          %s1011 = smul.u32 2, %s24
          %s1013 = ssub.s32 256, 256
          %1014 = vsyncadd %s1004, %s1013
          %s1015 = smul.addr %s23, 4
          %s1016 = sadd.s32 %s1011, %s1015
          %s1017 = smul.addr %s1016, 64
          %s1018 = scalar_lea.hbm %s5, %s1017
          %s1019 = sshll.u32 %s1007, 4
          %s1020 = int_to_ptr.vmem [resolvable:$true] %s1019
          %1025 = dma.vmem_to_hbm [thread:$0]  %s1020, 256, %s1018, %s1004, 128, 128, 8
        $region44: #{tpu_custom_call.1} parent=39 // pred_fallthru
          _
      $region40: #{tpu_custom_call.1} parent=5 // pred_fallthru
        _
      %p1026 = scmp.le.s32.totalorder 2, %s14
      // Predicated region
      $region45: #{tpu_custom_call.1} parent=5 // pred_check
        %p1027 = pneg %p1026
      $region46: #{tpu_custom_call.1} parent=5 // pred_check_branch
        %1029 = sbr.rel (%p1027) target = $region48
      $region47: #{tpu_custom_call.1} parent=5 // pred_region
        %s1030 = ssub.s32 %s14, 2
        // Predicated region
        $region49: #{tpu_custom_call.1} parent=47 // pred_check
          %p1031 = pneg %p178
        $region50: #{tpu_custom_call.1} parent=47 // pred_check_branch
          %1033 = sbr.rel (%p1031) target = $region52
        $region51: #{tpu_custom_call.1} parent=47 // pred_region
          %s1034 = sand.u32 %s163, 1
          %s1035 = scalar_lea.sflag [#allocation3], %s1034
          %s1036 = sand.u32 %s163, 1
          %s1037 = smul.addr %s1036, 16
          %s1038 = scalar_lea.vmem [#allocation2], %s1037
          %1039 = dma.done %s1035, 256
        $region52: #{tpu_custom_call.1} parent=47 // pred_fallthru
          _
      $region48: #{tpu_custom_call.1} parent=5 // pred_fallthru
        _
    $region6: #{tpu_custom_call.1} parent=1 // loop_footer
      %s18 = sadd.s32 1, %s14
    $region7: #{tpu_custom_call.1} parent=1 // loop_footer_branch
      %13 = sbr.rel target = $region3
    $region8: #{tpu_custom_call.1} parent=1 // loop_exit
      _
    %1040 = vsyncpa [#allocation3], 1
    %s1041 = scalar_lea.sflag [#allocation3], 1
    %1042 = vsyncpa %s1041, 1

</llo_original>
